<compile_context>
chip_gen: v6e
topology: v6e:2x2x1
jax: 0.10.0
libtpu: 0.0.40
codegen_flags: <defaults>
</compile_context>

<pallas_src>
import math

import jax
import jax.numpy as jnp
import numpy as np
from jax.experimental import pallas as pl
from jax.experimental.pallas import tpu as pltpu

_LOG_2PI = math.log(2.0 * math.pi)


def _normal_logprob_kernel(params_ref, z_ref, out_ref):
    """params_ref: SMEM (1, 2*D + 1) = [mu_0..mu_{D-1}, 1/sd_0..1/sd_{D-1}, const]
       z_ref:      VMEM (D, TR, 128)  -- batch rows lane-dense
       out_ref:    VMEM (TR, 128)     -- per-row log-density, lane-dense
    """
    d_dim = z_ref.shape[0]
    # const = logZ - sum(log sd) - 0.5*D*log(2*pi)  (precomputed in wrapper)
    acc = jnp.zeros(out_ref.shape, jnp.float32) + params_ref[0, 2 * d_dim]
    for d in range(d_dim):                       # D is tiny & static: unroll
        diff = (z_ref[d] - params_ref[0, d]) * params_ref[0, d_dim + d]
        acc = acc - 0.5 * (diff * diff)
    out_ref[...] = acc


def normal_logprob(z, mean, std, *, tn=131072):
    """Pallas equivalent of Normal(mean, std).forward(z).

    z:    (N, D) float32
    mean: (1, D) float32
    std:  (1, D) float32
    tn:   batch rows per grid step (tuned; rounded to lane/sublane multiples)
    returns (N, 1) float32
    """
    LANE, SUB = 128, 8

    z = z.astype(jnp.float32)
    mu = mean.reshape(-1).astype(jnp.float32)        # (D,)
    sd = std.reshape(-1).astype(jnp.float32)         # (D,)
    d_dim = int(mu.shape[0])
    n = int(z.shape[0])

    # ---- hoisted parameter-only math (runs once, outside the kernel) ----
    inv_sd = 1.0 / sd
    log_sd = jnp.log(sd)
    log_z = 0.5 * d_dim * _LOG_2PI + jnp.sum(log_sd)            # module's logZ
    const = log_z - jnp.sum(log_sd) - 0.5 * d_dim * _LOG_2PI    # ~= 0, kept for fidelity
    params = jnp.concatenate([mu, inv_sd, const.reshape(1)]).reshape(1, -1)
    p_len = 2 * d_dim + 1

    # ---- lane-dense relayout: batch rows onto (sublane, lane) slabs ----
    n_rows = -(-n // LANE)                           # ceil(N / 128)
    tr = max(SUB, min(tn // LANE, n_rows))           # sublane rows per tile
    tr = max(SUB, (tr // SUB) * SUB)
    grid_rows = -(-n_rows // tr)
    if grid_rows == 1 and n_rows > SUB:
        # split so both v7x TensorCores get a parallel tile
        tr = max(SUB, ((-(-n_rows // 2)) + SUB - 1) // SUB * SUB)
        grid_rows = -(-n_rows // tr)
    n_rows_pad = grid_rows * tr
    n_pad = n_rows_pad * LANE

    z_pad = jnp.pad(z, ((0, n_pad - n), (0, 0)))
    # (n_pad, D) -> (D, n_rows_pad, 128): batch on lanes, D unrolled in-kernel
    z3 = z_pad.T.reshape(d_dim, n_rows_pad, LANE)

    out3 = pl.pallas_call(
        _normal_logprob_kernel,
        out_shape=jax.ShapeDtypeStruct((n_rows_pad, LANE), jnp.float32),
        grid_spec=pl.GridSpec(
            grid=(grid_rows,),
            in_specs=[
                pl.BlockSpec((1, p_len), lambda i: (0, 0),
                             memory_space=pltpu.MemorySpace.SMEM),   # params
                pl.BlockSpec((d_dim, tr, LANE), lambda i: (0, i, 0)),  # z slab
            ],
            out_specs=pl.BlockSpec((tr, LANE), lambda i: (i, 0)),      # lane-dense out
        ),
        compiler_params=pltpu.CompilerParams(
            dimension_semantics=("parallel",)),
    )(params, z3)

    return out3.reshape(n_pad, 1)[:n]


def _reference_logprob(z, mean, std):
    """Pure-JAX reference mirroring the PyTorch Normal.forward exactly."""
    d_dim = mean.shape[1]
    lp = -0.5 * ((z - mean) / std) ** 2 - jnp.log(std) - 0.5 * _LOG_2PI
    lp = jnp.sum(lp, axis=1, keepdims=True)
    log_z = 0.5 * d_dim * _LOG_2PI + jnp.sum(jnp.log(std))
    return lp + log_z


if __name__ == "__main__":
    key = jax.random.PRNGKey(0)
    k_z, k_mu, k_sd = jax.random.split(key, 3)

    N, D = 16, 2
    z = jax.random.normal(k_z, (N, D), dtype=jnp.float32) * 2.0
    mean = jax.random.normal(k_mu, (1, D), dtype=jnp.float32) * 3.0
    std = jax.random.uniform(k_sd, (1, D), dtype=jnp.float32,
                             minval=0.5, maxval=1.5)

    out = normal_logprob(z, mean, std)
    out = jax.block_until_ready(out)

    ref = _reference_logprob(z, mean, std)
    assert out.shape == (N, 1) and out.dtype == jnp.float32
    np.testing.assert_allclose(np.asarray(out), np.asarray(ref),
                               rtol=1e-5, atol=1e-5)
    print("KERNEL_OK")
</pallas_src>

<mosaic_0001>
module attributes {stable_mosaic.version = 11 : i64} {
  func.func @_normal_logprob_kernel(%arg0: i32, %arg1: memref<1x5xf32, #tpu.memory_space<smem>>, %arg2: memref<2x8x128xf32, #tpu.memory_space<vmem>>, %arg3: memref<8x128xf32, #tpu.memory_space<vmem>>) attributes {dimension_semantics = [#tpu.dimension_semantics<parallel>], iteration_bounds = array<i64: 1>, scalar_prefetch = 0 : i64, scratch_operands = 0 : i64, tpu.core_type = #tpu.core_type<tc>, window_params = [{transform_indices = @transform_0, window_bounds = array<i64: 1, 5>}, {transform_indices = @transform_1, window_bounds = array<i64: 2, 8, 128>}, {transform_indices = @transform_2, window_bounds = array<i64: 8, 128>}]} {
    %cst = arith.constant 0.000000e+00 : f32
    %0 = vector.broadcast %cst : f32 to vector<8x128xf32>
    %c0 = arith.constant 0 : index
    %c4 = arith.constant 4 : index
    %1 = memref.load %arg1[%c0, %c4] : memref<1x5xf32, #tpu.memory_space<smem>>
    %2 = vector.broadcast %1 : f32 to vector<8x128xf32>
    %3 = arith.addf %0, %2 : vector<8x128xf32>
    %c0_0 = arith.constant 0 : index
    %c0_1 = arith.constant 0 : index
    %c0_2 = arith.constant 0 : index
    %4 = vector.load %arg2[%c0_0, %c0_1, %c0_2] : memref<2x8x128xf32, #tpu.memory_space<vmem>>, vector<1x8x128xf32>
    %5 = vector.shape_cast %4 : vector<1x8x128xf32> to vector<8x128xf32>
    %c0_3 = arith.constant 0 : index
    %c0_4 = arith.constant 0 : index
    %6 = memref.load %arg1[%c0_3, %c0_4] : memref<1x5xf32, #tpu.memory_space<smem>>
    %7 = vector.broadcast %6 : f32 to vector<8x128xf32>
    %8 = arith.subf %5, %7 : vector<8x128xf32>
    %c0_5 = arith.constant 0 : index
    %c2 = arith.constant 2 : index
    %9 = memref.load %arg1[%c0_5, %c2] : memref<1x5xf32, #tpu.memory_space<smem>>
    %10 = vector.broadcast %9 : f32 to vector<8x128xf32>
    %11 = arith.mulf %8, %10 : vector<8x128xf32>
    %12 = arith.mulf %11, %11 : vector<8x128xf32>
    %cst_6 = arith.constant 5.000000e-01 : f32
    %13 = vector.broadcast %cst_6 : f32 to vector<8x128xf32>
    %14 = arith.mulf %13, %12 : vector<8x128xf32>
    %15 = arith.subf %3, %14 : vector<8x128xf32>
    %c1 = arith.constant 1 : index
    %c0_7 = arith.constant 0 : index
    %c0_8 = arith.constant 0 : index
    %16 = vector.load %arg2[%c1, %c0_7, %c0_8] : memref<2x8x128xf32, #tpu.memory_space<vmem>>, vector<1x8x128xf32>
    %17 = vector.shape_cast %16 : vector<1x8x128xf32> to vector<8x128xf32>
    %c0_9 = arith.constant 0 : index
    %c1_10 = arith.constant 1 : index
    %18 = memref.load %arg1[%c0_9, %c1_10] : memref<1x5xf32, #tpu.memory_space<smem>>
    %19 = vector.broadcast %18 : f32 to vector<8x128xf32>
    %20 = arith.subf %17, %19 : vector<8x128xf32>
    %c0_11 = arith.constant 0 : index
    %c3 = arith.constant 3 : index
    %21 = memref.load %arg1[%c0_11, %c3] : memref<1x5xf32, #tpu.memory_space<smem>>
    %22 = vector.broadcast %21 : f32 to vector<8x128xf32>
    %23 = arith.mulf %20, %22 : vector<8x128xf32>
    %24 = arith.mulf %23, %23 : vector<8x128xf32>
    %cst_12 = arith.constant 5.000000e-01 : f32
    %25 = vector.broadcast %cst_12 : f32 to vector<8x128xf32>
    %26 = arith.mulf %25, %24 : vector<8x128xf32>
    %27 = arith.subf %15, %26 : vector<8x128xf32>
    %c0_13 = arith.constant 0 : index
    %c0_14 = arith.constant 0 : index
    %28 = vector.load %arg3[%c0_13, %c0_14] : memref<8x128xf32, #tpu.memory_space<vmem>>, vector<8x128xf32>
    tpu.vector_store %arg3[%c0_13, %c0_14], %27 {strides = array<i32>} : memref<8x128xf32, #tpu.memory_space<vmem>>, vector<8x128xf32>,
    return
  }
  func.func @transform_0(%arg0: i32) -> (i32, i32) {
    %c0_i32 = arith.constant 0 : i32
    %c0_i32_0 = arith.constant 0 : i32
    %c0_i32_1 = arith.constant 0 : i32
    return %c0_i32, %c0_i32_0 : i32, i32
  }
  func.func @transform_1(%arg0: i32) -> (i32, i32, i32) {
    %c0_i32 = arith.constant 0 : i32
    %c0_i32_0 = arith.constant 0 : i32
    %c0_i32_1 = arith.constant 0 : i32
    return %c0_i32, %arg0, %c0_i32_0 : i32, i32, i32
  }
  func.func @transform_2(%arg0: i32) -> (i32, i32) {
    %c0_i32 = arith.constant 0 : i32
    %c0_i32_0 = arith.constant 0 : i32
    return %arg0, %c0_i32 : i32, i32
  }
}

</mosaic_0001>

<llo_original>
// kernel: tpu_custom_call.1
$region0: #{tpu_custom_call.1}
  #allocation0 [shape = 'u32[]', space=smem, size = 0x4, offset = 0x4, fixed_abs, tag = 'smem constant byte address 0x4 - core index']
  #allocation1 [shape = 'u32[144,128]{1,0:T(1,128)}', space=vmem, size = 0x12000, scoped, tag = 'internal scratch']
  %s0 = inlined_call_operand.hbm [shape: f32[1,5], index: 0, kind: input, shape index: {}]
  %s1 = inlined_call_operand.hbm [shape: f32[2,8,128], index: 1, kind: input, shape index: {}]
  %s2 = inlined_call_operand.hbm [shape: f32[8,128], index: 2, kind: output, shape index: {}]
  %s3 = sld [smem:[#allocation0]]
  $region26: #{tpu_custom_call.1} parent=0
    _
  %s5 = ssub.s32 1, %s3
  %s6 = scalar_select 0, %s5, %s3
  $region1: #{tpu_custom_call.1} parent=0
    #allocation2 [shape = 'u8[512]{0}', space=smem, size = 0x200, scoped, tag = 'input window, operand 0, single buffered']
    #allocation3 [shape = 's32[1]{0}', space=sflag, size = 0x4, scoped, tag = 'scoped memory for tpu_custom_call.1']
    #allocation4 [shape = 's32[1]{0}', space=sflag, size = 0x4, scoped, tag = 'scoped memory for tpu_custom_call.1']
    #allocation5 [shape = 's32[1]{0}', space=sflag, size = 0x4, scoped, tag = 'scoped memory for tpu_custom_call.1']
    #allocation6 [shape = 'u8[8192]{0}', space=vmem, size = 0x2000, scoped, tag = 'input window, operand 1, single buffered']
    #allocation7 [shape = 'u8[4096]{0}', space=vmem, size = 0x1000, scoped, tag = 'output window, operand 0, single buffered']
    %7 = vsyncpa [#allocation5], 0
    %8 = vsyncpa [#allocation3], 0
    %9 = vsyncpa [#allocation4], 0
    // Predicated region
    $region2: #{tpu_custom_call.1} parent=1 // pred_check
      _
    $region3: #{tpu_custom_call.1} parent=1 // pred_check_branch
      %11 = sbr.rel (0) target = $region5
    $region4: #{tpu_custom_call.1} parent=1 // pred_region
      %s13 = ssub.s32 16, 16
      %14 = vsyncadd [#allocation5], %s13
      %17 = dma.hbm_to_smem %s0, 16, [#allocation2], [#allocation5]
    $region5: #{tpu_custom_call.1} parent=1 // pred_fallthru
      _
    // Predicated region
    $region6: #{tpu_custom_call.1} parent=1 // pred_check
      _
    $region7: #{tpu_custom_call.1} parent=1 // pred_check_branch
      %19 = sbr.rel (0) target = $region9
    $region8: #{tpu_custom_call.1} parent=1 // pred_region
      %s21 = ssub.s32 256, 256
      %22 = vsyncadd [#allocation3], %s21
      %s23 = sshll.u32 [#allocation6], 4
      %s24 = int_to_ptr.vmem [resolvable:$true] %s23
      %29 = dma.hbm_to_vmem [thread:$0]  %s1, 256, %s24, [#allocation3], 128, 128, 8
    $region9: #{tpu_custom_call.1} parent=1 // pred_fallthru
      _
    // Predicated region
    $region10: #{tpu_custom_call.1} parent=1 // pred_check
      _
    $region11: #{tpu_custom_call.1} parent=1 // pred_check_branch
      %31 = sbr.rel (0) target = $region13
    $region12: #{tpu_custom_call.1} parent=1 // pred_region
      %32 = dma.done [#allocation5], 16
    $region13: #{tpu_custom_call.1} parent=1 // pred_fallthru
      _
    // Predicated region
    $region14: #{tpu_custom_call.1} parent=1 // pred_check
      _
    $region15: #{tpu_custom_call.1} parent=1 // pred_check_branch
      %34 = sbr.rel (0) target = $region17
    $region16: #{tpu_custom_call.1} parent=1 // pred_region
      %35 = dma.done [#allocation3], 256
    $region17: #{tpu_custom_call.1} parent=1 // pred_fallthru
      _
    %36 = sfence
    %s37 = sld [smem:[#allocation2 + $0x4]]
    %v38 = vstv %s37
    %v39 = vadd.f32 %v38, 0.0
    %v40 = vld [vmem:[#allocation6] sm:$0xff]
    %s41 = sld [smem:[#allocation2]]
    %v42 = vstv %s41
    %v43 = vsub.f32 %v40, %v42
    %s44 = sld [smem:[#allocation2 + $0x2]]
    %v45 = vstv %s44
    %v46 = vmul.f32 %v43, %v45
    %v47 = vmul.f32 %v46, %v46
    %v48 = vmul.f32 %v47, 0.5
    %v49 = vsub.f32 %v39, %v48
    %s50 = scalar_lea.vmem [#allocation6], 8
    %v51 = vld [vmem:[%s50] sm:$0xff]
    %s52 = sld [smem:[#allocation2 + $0x1]]
    %v53 = vstv %s52
    %v54 = vsub.f32 %v51, %v53
    %s55 = sld [smem:[#allocation2 + $0x3]]
    %v56 = vstv %s55
    %v57 = vmul.f32 %v54, %v56
    %v58 = vmul.f32 %v57, %v57
    %v59 = vmul.f32 %v58, 0.5
    %v60 = vsub.f32 %v49, %v59
    %61 = vst [vmem:[#allocation7] sm:$0xff] %v60
    // Predicated region
    $region18: #{tpu_custom_call.1} parent=1 // pred_check
      _
    $region19: #{tpu_custom_call.1} parent=1 // pred_check_branch
      %63 = sbr.rel (0) target = $region21
    $region20: #{tpu_custom_call.1} parent=1 // pred_region
      %s65 = ssub.s32 128, 128
      %66 = vsyncadd [#allocation4], %s65
      %s68 = sshll.u32 [#allocation7], 4
      %s69 = int_to_ptr.vmem [resolvable:$true] %s68
      %71 = dma.vmem_to_hbm [thread:$0]  %s69, 128, %s2, [#allocation4]
    $region21: #{tpu_custom_call.1} parent=1 // pred_fallthru
      _
    // Predicated region
    $region22: #{tpu_custom_call.1} parent=1 // pred_check
      _
    $region23: #{tpu_custom_call.1} parent=1 // pred_check_branch
      %73 = sbr.rel (0) target = $region25
    $region24: #{tpu_custom_call.1} parent=1 // pred_region
      %74 = dma.done [#allocation4], 128
    $region25: #{tpu_custom_call.1} parent=1 // pred_fallthru
      _
    %75 = vsyncpa [#allocation3], 1
    %76 = vsyncpa [#allocation4], 1
    %77 = vsyncpa [#allocation5], 1

</llo_original>
